<compile_context>
chip_gen: v7x
topology: tpu7x:2x2x1
jax: 0.10.0
libtpu: 0.0.40
codegen_flags: <defaults>
</compile_context>

<pallas_src>
import jax
import jax.numpy as jnp
from jax.experimental import pallas as pl
from jax.experimental.pallas import tpu as pltpu

N_OUT = 1                # Model(N=1, M) -> Linear(28*28, 1)
IN_FEATURES = 28 * 28


def linear_relu_kernel(x_ref, w_ref, b_ref, o_ref):
    # x_ref: (TB, 784) bf16 VMEM   w_ref: (1, 784) f32 VMEM (resident, fetched once)
    # b_ref: (1, 1)    f32 SMEM    o_ref: (TB, 1)  f32 VMEM
    x = x_ref[...].astype(jnp.float32)            # upcast: v5e VPU has no bf16 ALU
    w = w_ref[...]                                # (1, 784) broadcasts over rows
    y = jnp.sum(x * w, axis=-1, keepdims=True)    # VPU multiply + lane reduce -> (TB, 1)
    o_ref[...] = jnp.maximum(y + b_ref[0, 0], 0.0)


def _round_up(n, m):
    return ((n + m - 1) // m) * m


def _pick_tile(batch):
    """Generation-aware batch tile + scoped VMEM limit."""
    try:
        vmem_cap = int(pltpu.get_tpu_info().vmem_capacity_bytes)
    except Exception:
        vmem_cap = 64 << 20                       # conservative (v7x-sized) fallback
    if vmem_cap >= (128 << 20):                   # v5e / v6e: deep tiles amortize grid overhead
        tb_target, vmem_limit = 8192, 80 << 20
    else:                                         # v7x: 64 MiB VMEM per TensorCore
        tb_target, vmem_limit = 2048, 40 << 20
    # tile rows must be a multiple of 8 (sublane); don't over-pad tiny batches
    tb = min(tb_target, max(8, _round_up(batch, 8)))
    return tb, vmem_limit


def linear_relu(x2d_bf16, w_row, b11):
    b = x2d_bf16.shape[0]
    tb, vmem_limit = _pick_tile(b)
    b_pad = _round_up(b, tb)
    if b_pad != b:
        x2d_bf16 = jnp.pad(x2d_bf16, ((0, b_pad - b), (0, 0)))

    out = pl.pallas_call(
        linear_relu_kernel,
        out_shape=jax.ShapeDtypeStruct((b_pad, N_OUT), jnp.float32),
        grid=(b_pad // tb,),
        in_specs=[
            pl.BlockSpec((tb, IN_FEATURES), lambda i: (i, 0)),       # x tile (pipelined)
            pl.BlockSpec((1, IN_FEATURES), lambda i: (0, 0)),        # weight row (resident)
            pl.BlockSpec(memory_space=pltpu.MemorySpace.SMEM),       # bias scalar
        ],
        out_specs=pl.BlockSpec((tb, N_OUT), lambda i: (i, 0)),
        compiler_params=pltpu.CompilerParams(
            dimension_semantics=("parallel",),                       # megacore on v7x
            vmem_limit_bytes=vmem_limit,
        ),
        cost_estimate=pl.CostEstimate(
            flops=2 * b_pad * IN_FEATURES,
            transcendentals=0,
            bytes_accessed=b_pad * IN_FEATURES * 2 + b_pad * 4 + IN_FEATURES * 4,
        ),
    )(x2d_bf16, w_row, b11)
    return out[:b]


def model_forward(x_nchw, weight, bias):
    # glue: flatten NCHW -> (B, 784) like PyTorch's Linear(28*28, N) implies
    b = x_nchw.shape[0]
    x2d = x_nchw.reshape(b, IN_FEATURES).astype(jnp.bfloat16)   # halve HBM traffic
    w_row = weight.reshape(1, IN_FEATURES).astype(jnp.float32)  # lane-dense (1, 784)
    b11 = bias.reshape(1, 1).astype(jnp.float32)                # SMEM scalar
    return linear_relu(x2d, w_row, b11)


if __name__ == "__main__":
    key = jax.random.PRNGKey(0)
    kx, kw, kb = jax.random.split(key, 3)

    # deterministic params mirroring nn.Linear's U(-1/sqrt(in), 1/sqrt(in))
    bound = 1.0 / (IN_FEATURES ** 0.5)
    weight = jax.random.uniform(kw, (N_OUT, IN_FEATURES), jnp.float32, -bound, bound)
    bias = jax.random.uniform(kb, (N_OUT,), jnp.float32, -bound, bound)

    # small input consistent with the module: (B, 1, 28, 28)
    B = 4
    x1 = jax.random.normal(kx, (B, 1, 28, 28), jnp.float32)

    out = jax.block_until_ready(model_forward(x1, weight, bias))

    # reference on the same bf16-quantized activations the kernel reads (f32 accumulate)
    x_q = x1.reshape(B, IN_FEATURES).astype(jnp.bfloat16).astype(jnp.float32)
    ref = jnp.maximum(jnp.sum(x_q * weight, axis=-1, keepdims=True) + bias, 0.0)

    assert out.shape == (B, N_OUT)
    assert jnp.allclose(out, ref, atol=1e-4, rtol=1e-4), "mismatch vs reference"
    print("KERNEL_OK")
</pallas_src>

<mosaic_0001>
module attributes {stable_mosaic.version = 11 : i64} {
  func.func @linear_relu_kernel(%arg0: i32, %arg1: memref<8x784xbf16, #tpu.memory_space<vmem>>, %arg2: memref<1x784xf32, #tpu.memory_space<vmem>>, %arg3: memref<1x1xf32, #tpu.memory_space<smem>>, %arg4: memref<8x1xf32, #tpu.memory_space<vmem>>) attributes {dimension_semantics = [#tpu.dimension_semantics<parallel>], iteration_bounds = array<i64: 1>, scalar_prefetch = 0 : i64, scratch_operands = 0 : i64, tpu.core_type = #tpu.core_type<tc>, window_params = [{transform_indices = @transform_0, window_bounds = array<i64: 8, 784>}, {pipeline_mode = #tpu.pipeline_mode<synchronous>, transform_indices = @transform_1, window_bounds = array<i64: 1, 784>}, {transform_indices = @transform_2, window_bounds = array<i64: 1, 1>}, {transform_indices = @transform_3, window_bounds = array<i64: 8, 1>}]} {
    %c0 = arith.constant 0 : index
    %c0_0 = arith.constant 0 : index
    %0 = vector.load %arg1[%c0, %c0_0] : memref<8x784xbf16, #tpu.memory_space<vmem>>, vector<8x784xbf16>
    %1 = arith.extf %0 : vector<8x784xbf16> to vector<8x784xf32>
    %c0_1 = arith.constant 0 : index
    %c0_2 = arith.constant 0 : index
    %2 = vector.load %arg2[%c0_1, %c0_2] : memref<1x784xf32, #tpu.memory_space<vmem>>, vector<1x784xf32>
    %3 = vector.broadcast %2 : vector<1x784xf32> to vector<8x784xf32>
    %4 = arith.mulf %1, %3 : vector<8x784xf32>
    %cst = arith.constant dense<0.000000e+00> : vector<8xf32>
    %5 = vector.multi_reduction <add>, %4, %cst [1] : vector<8x784xf32> to vector<8xf32>
    %6 = vector.shape_cast %5 : vector<8xf32> to vector<8x1xf32>
    %c0_3 = arith.constant 0 : index
    %c0_4 = arith.constant 0 : index
    %7 = memref.load %arg3[%c0_3, %c0_4] : memref<1x1xf32, #tpu.memory_space<smem>>
    %8 = vector.broadcast %7 : f32 to vector<8x1xf32>
    %9 = arith.addf %6, %8 : vector<8x1xf32>
    %cst_5 = arith.constant 0.000000e+00 : f32
    %10 = vector.broadcast %cst_5 : f32 to vector<8x1xf32>
    %11 = arith.maximumf %9, %10 : vector<8x1xf32>
    %c0_6 = arith.constant 0 : index
    %c0_7 = arith.constant 0 : index
    %12 = vector.load %arg4[%c0_6, %c0_7] : memref<8x1xf32, #tpu.memory_space<vmem>>, vector<8x1xf32>
    tpu.vector_store %arg4[%c0_6, %c0_7], %11 {strides = array<i32>} : memref<8x1xf32, #tpu.memory_space<vmem>>, vector<8x1xf32>,
    return
  }
  func.func @transform_0(%arg0: i32) -> (i32, i32) {
    %c0_i32 = arith.constant 0 : i32
    %c0_i32_0 = arith.constant 0 : i32
    return %arg0, %c0_i32 : i32, i32
  }
  func.func @transform_1(%arg0: i32) -> (i32, i32) {
    %c0_i32 = arith.constant 0 : i32
    %c0_i32_0 = arith.constant 0 : i32
    %c0_i32_1 = arith.constant 0 : i32
    return %c0_i32, %c0_i32_0 : i32, i32
  }
  func.func @transform_2(%arg0: i32) -> (i32, i32) {
    %c0_i32 = arith.constant 0 : i32
    %c0_i32_0 = arith.constant 0 : i32
    %c0_i32_1 = arith.constant 0 : i32
    return %c0_i32, %c0_i32_0 : i32, i32
  }
  func.func @transform_3(%arg0: i32) -> (i32, i32) {
    %c0_i32 = arith.constant 0 : i32
    %c0_i32_0 = arith.constant 0 : i32
    return %arg0, %c0_i32 : i32, i32
  }
}

</mosaic_0001>

<llo_original>
// kernel: tpu_custom_call.1
$region0: #{tpu_custom_call.1}
  #allocation0 [shape = 'u32[]', space=smem, size = 0x4, offset = 0x4, fixed_abs, tag = 'smem constant byte address 0x4 - core index']
  #allocation1 [shape = 'u32[144,128]{1,0:T(1,128)}', space=vmem, size = 0x12000, scoped, tag = 'internal scratch']
  #allocation2 [shape = 'f32[1,1]{1,0:T(1,128)S(6)}', space=smem, size = 0x200, scoped, tag = 'scoped memory for tpu_custom_call.1']
  %s0 = inlined_call_operand.hbm [shape: bf16[8,784], index: 0, kind: input, shape index: {}]
  %s1 = inlined_call_operand.vmem [shape: f32[1,784], index: 1, kind: input, shape index: {}]
  %s2 = inlined_call_operand.<no memory space> [shape: f32[1,1], index: 2, kind: input, shape index: {}]
  %s3 = inlined_call_operand.vmem [shape: f32[8,1], index: 3, kind: output, shape index: {}]
  %s4 = sld [smem:[#allocation0]]
  $region26: #{tpu_custom_call.1} parent=0
    _
  %s6 = ssub.s32 1, %s4
  %s7 = scalar_select 0, %s6, %s4
  %8 = sst [smem:[#allocation2]] %s2
  $region1: #{tpu_custom_call.1} parent=0
    #allocation3 [shape = 'u8[14336]{0}', space=vmem, size = 0x3800, scoped, tag = 'input window, operand 0, single buffered']
    #allocation4 [shape = 's32[1]{0}', space=sflag, size = 0x4, scoped, tag = 'scoped memory for tpu_custom_call.1']
    %9 = vsyncpa [#allocation4], 0
    // Predicated region
    $region2: #{tpu_custom_call.1} parent=1 // pred_check
      _
    $region3: #{tpu_custom_call.1} parent=1 // pred_check_branch
      %11 = sbr.rel (0) target = $region5
    $region4: #{tpu_custom_call.1} parent=1 // pred_region
      %s13 = ssub.s32 448, 448
      %14 = vsyncadd [#allocation4], %s13
      %s16 = sshll.u32 [#allocation3], 4
      %s17 = int_to_ptr.vmem [resolvable:$true] %s16
      %19 = dma.hbm_to_vmem [thread:$0]  %s0, 448, %s17, [#allocation4]
    $region5: #{tpu_custom_call.1} parent=1 // pred_fallthru
      _
    // Predicated region
    $region6: #{tpu_custom_call.1} parent=1 // pred_check
      _
    $region7: #{tpu_custom_call.1} parent=1 // pred_check_branch
      %21 = sbr.rel (0) target = $region9
    $region8: #{tpu_custom_call.1} parent=1 // pred_region
      _
    $region9: #{tpu_custom_call.1} parent=1 // pred_fallthru
      _
    // Predicated region
    $region10: #{tpu_custom_call.1} parent=1 // pred_check
      _
    $region11: #{tpu_custom_call.1} parent=1 // pred_check_branch
      %23 = sbr.rel (0) target = $region13
    $region12: #{tpu_custom_call.1} parent=1 // pred_region
      _
    $region13: #{tpu_custom_call.1} parent=1 // pred_fallthru
      _
    // Predicated region
    $region14: #{tpu_custom_call.1} parent=1 // pred_check
      _
    $region15: #{tpu_custom_call.1} parent=1 // pred_check_branch
      %25 = sbr.rel (0) target = $region17
    $region16: #{tpu_custom_call.1} parent=1 // pred_region
      %26 = dma.done [#allocation4], 448
    $region17: #{tpu_custom_call.1} parent=1 // pred_fallthru
      _
    %v27 = vld [vmem:[#allocation3] sm:$0xff]
    %v28 = vld [vmem:[#allocation3 + $0x8] sm:$0xff]
    %v29 = vld [vmem:[#allocation3 + $0x10] sm:$0xff]
    %v30 = vld [vmem:[#allocation3 + $0x18] sm:$0xf]
    %v31 = vunpack.c.l.bf16 %v27
    %v32 = vunpack.c.h.bf16 %v27
    %v33 = vunpack.c.l.bf16 %v28
    %v34 = vunpack.c.h.bf16 %v28
    %v35 = vunpack.c.l.bf16 %v29
    %v36 = vunpack.c.h.bf16 %v29
    %v37 = vunpack.c.l.bf16 %v30
    %v38 = vld [vmem:[%s1] sm:$0x7f]
    %v40 = vlaneseq
    %v41 = vshrl.u32 %v40, 7
    %v42 = vsub.s32 0, %v41
    %v43 = vrot.slane %v38, %v42
    %v44 = vlaneseq
    %v45 = vshrl.u32 %v44, 7
    %v46 = vsub.s32 1, %v45
    %v47 = vrot.slane %v38, %v46
    %v48 = vlaneseq
    %v49 = vshrl.u32 %v48, 7
    %v50 = vsub.s32 2, %v49
    %v51 = vrot.slane %v38, %v50
    %v52 = vlaneseq
    %v53 = vshrl.u32 %v52, 7
    %v54 = vsub.s32 3, %v53
    %v55 = vrot.slane %v38, %v54
    %v56 = vlaneseq
    %v57 = vshrl.u32 %v56, 7
    %v58 = vsub.s32 4, %v57
    %v59 = vrot.slane %v38, %v58
    %v60 = vlaneseq
    %v61 = vshrl.u32 %v60, 7
    %v62 = vsub.s32 5, %v61
    %v63 = vrot.slane %v38, %v62
    %v64 = vlaneseq
    %v65 = vshrl.u32 %v64, 7
    %v66 = vsub.s32 6, %v65
    %v67 = vrot.slane %v38, %v66
    %v75 = vmul.f32 %v31, %v43
    %v76 = vmul.f32 %v32, %v47
    %v77 = vmul.f32 %v33, %v51
    %v78 = vmul.f32 %v34, %v55
    %v79 = vmul.f32 %v35, %v59
    %v80 = vmul.f32 %v36, %v63
    %v81 = vmul.f32 %v37, %v67
    %v82 = vadd.f32 %v75, %v76
    %v83 = vadd.f32 %v82, %v77
    %v84 = vadd.f32 %v83, %v78
    %v85 = vadd.f32 %v84, %v79
    %v86 = vadd.f32 %v85, %v80
    %vm87 = vcmask 130048
    %v88 = vsel %vm87, %v81, 0.0
    %v89 = vadd.f32 %v86, %v88
    %90 = vadd.xlane.f32.xlu0 %v89
    %v91 = vpop.xlane.xlu0 %90
    %s92 = sld [smem:[#allocation2]]
    %v93 = vstv %s92
    %v94 = vadd.f32 %v91, %v93
    %v95 = vmax.f32 %v94, 0.0
    %vm96 = vcmask 7168
    %97 = vst.msk [vmem:[%s3] sm:$0xff] %vm96, %v95
    // Predicated region
    $region18: #{tpu_custom_call.1} parent=1 // pred_check
      _
    $region19: #{tpu_custom_call.1} parent=1 // pred_check_branch
      %99 = sbr.rel (0) target = $region21
    $region20: #{tpu_custom_call.1} parent=1 // pred_region
      _
    $region21: #{tpu_custom_call.1} parent=1 // pred_fallthru
      _
    // Predicated region
    $region22: #{tpu_custom_call.1} parent=1 // pred_check
      _
    $region23: #{tpu_custom_call.1} parent=1 // pred_check_branch
      %101 = sbr.rel (0) target = $region25
    $region24: #{tpu_custom_call.1} parent=1 // pred_region
      _
    $region25: #{tpu_custom_call.1} parent=1 // pred_fallthru
      _
    %102 = vsyncpa [#allocation4], 1

</llo_original>
